<compile_context>
chip_gen: v7x
topology: tpu7x:2x2x1
jax: 0.10.0
libtpu: 0.0.40
codegen_flags: <defaults>
</compile_context>

<pallas_src>
import functools

import jax
import jax.numpy as jnp
from jax.experimental import pallas as pl
from jax.experimental.pallas import tpu as pltpu


# ----------------------------------------------------------------------------
# Fused kernel: one-hot embedding gather -> n conv branches (im2col matmul +
# maxpool) -> concat -> bias + ReLU -> fc.  One grid step = one batch tile.
# ----------------------------------------------------------------------------
def _textcnn_kernel(tok_ref, table_ref, *refs, filter_sizes):
    # tok_ref:   (bt, 1, L)  int32
    # table_ref: (V, E)      bf16
    # refs: conv_w_flat[n] (s*E, F) bf16, conv_b_all (1, n*F) f32,
    #       fc_w (n*F, C) bf16, fc_b (1, C) f32, out_ref (bt, 1, C) f32
    n = len(filter_sizes)
    conv_w_refs = refs[0:n]
    conv_b_ref = refs[n]
    fc_w_ref = refs[n + 1]
    fc_b_ref = refs[n + 2]
    out_ref = refs[n + 3]

    bt = tok_ref.shape[0]
    L = tok_ref.shape[2]
    V, E = table_ref.shape
    lp = table_ref.dtype                        # low-precision MXU input dtype

    # ---- Embedding lookup as a one-hot matmul on the MXU --------------------
    tok = tok_ref[...].reshape(bt, L)                             # (bt, L) int32
    vocab_iota = jax.lax.broadcasted_iota(jnp.int32, (bt, L, V), 2)
    onehot = (tok[:, :, None] == vocab_iota).astype(lp)           # (bt, L, V)
    emb = jnp.dot(onehot.reshape(bt * L, V), table_ref[...],
                  preferred_element_type=jnp.float32)             # (bt*L, E) f32
    emb = emb.reshape(bt, L, E).astype(lp)                        # bf16 conv input

    # ---- Conv branches: im2col -> single matmul -> global max-pool ----------
    pooled = []
    for s, w_ref in zip(filter_sizes, conv_w_refs):
        T = L - s + 1
        F = w_ref.shape[-1]
        patches = jnp.concatenate(
            [emb[:, j:j + T, :] for j in range(s)], axis=-1)      # (bt, T, s*E)
        conv = jnp.dot(patches.reshape(bt * T, s * E), w_ref[...],
                       preferred_element_type=jnp.float32)        # (bt*T, F) f32
        pooled.append(jnp.max(conv.reshape(bt, T, F), axis=1))    # (bt, F)

    # ---- Concat -> bias + ReLU (once, on (bt, n*F)) --------------------------
    feat = jnp.concatenate(pooled, axis=-1)                       # (bt, n*F) f32
    feat = jnp.maximum(feat + conv_b_ref[...], 0.0)

    # TODO(synk): nn.Dropout in training mode would need RNG; eval-mode
    # dropout == identity, matching PyTorch inference semantics.

    # ---- Final Linear --------------------------------------------------------
    logits = jnp.dot(feat.astype(fc_w_ref.dtype), fc_w_ref[...],
                     preferred_element_type=jnp.float32) + fc_b_ref[...]
    out_ref[...] = logits[:, None, :]                             # (bt, 1, C)


# ----------------------------------------------------------------------------
# Wrapper: dtype casts, weight flattening, batch-tiled parallel grid.
# ----------------------------------------------------------------------------
def textcnn_forward(token_ids, params, *, batch_tile=None):
    filter_sizes = tuple(params["filter_sizes"])
    n = len(filter_sizes)

    table = params["embedding"].astype(jnp.bfloat16)                    # (V, E)
    conv_w = [w.reshape(-1, w.shape[-1]).astype(jnp.bfloat16)           # (s*E, F)
              for w in params["conv_w"]]
    conv_b_all = jnp.concatenate(
        [b.reshape(1, -1) for b in params["conv_b"]],
        axis=-1).astype(jnp.float32)                                    # (1, n*F)
    fc_w = params["fc_w"].astype(jnp.bfloat16)                          # (n*F, C)
    fc_b = params["fc_b"].reshape(1, -1).astype(jnp.float32)            # (1, C)

    B, L = token_ids.shape
    V, E = table.shape
    F = conv_w[0].shape[-1]
    C = fc_w.shape[-1]

    if batch_tile is None:
        # Biggest tile (<=64 rows) dividing B that still yields >=2 grid steps,
        # so both v7x TensorCores get work via the "parallel" axis.
        target = min(max(1, B // 2), 64)
        batch_tile = next(t for t in range(target, 0, -1) if B % t == 0)
    assert B % batch_tile == 0
    grid = (B // batch_tile,)

    # 3-D views so block last-two-dims equal the full array dims (tile-legal
    # for any batch_tile); batch is the leading, freely-blocked axis.
    tok3 = token_ids.astype(jnp.int32).reshape(B, 1, L)

    flops = 2 * B * L * V * E + 2 * B * (n * F) * C
    bytes_accessed = (tok3.size * 4 + table.size * 2 + fc_w.size * 2
                      + fc_b.size * 4 + conv_b_all.size * 4 + B * C * 4)
    for s, w in zip(filter_sizes, conv_w):
        T = L - s + 1
        flops += 2 * B * T * (s * E) * F
        bytes_accessed += w.size * 2

    bcast2 = lambda i: (0, 0)
    in_specs = (
        [pl.BlockSpec((batch_tile, 1, L), lambda i: (i, 0, 0)),
         pl.BlockSpec((V, E), bcast2)]
        + [pl.BlockSpec(tuple(w.shape), bcast2) for w in conv_w]
        + [pl.BlockSpec(tuple(conv_b_all.shape), bcast2),
           pl.BlockSpec(tuple(fc_w.shape), bcast2),
           pl.BlockSpec(tuple(fc_b.shape), bcast2)]
    )

    kernel = functools.partial(_textcnn_kernel, filter_sizes=filter_sizes)
    out3 = pl.pallas_call(
        kernel,
        out_shape=jax.ShapeDtypeStruct((B, 1, C), jnp.float32),
        grid=grid,
        in_specs=in_specs,
        out_specs=pl.BlockSpec((batch_tile, 1, C), lambda i: (i, 0, 0)),
        compiler_params=pltpu.CompilerParams(
            dimension_semantics=("parallel",)),
        cost_estimate=pl.CostEstimate(
            flops=int(flops), transcendentals=0,
            bytes_accessed=int(bytes_accessed)),
    )(tok3, table, *conv_w, conv_b_all, fc_w, fc_b)
    return out3[:, 0, :]                                               # (B, C)


# ----------------------------------------------------------------------------
# Pure-JAX reference (same bf16 weight rounding, original PyTorch op order)
# for correctness checking.
# ----------------------------------------------------------------------------
def textcnn_reference(token_ids, params):
    table = params["embedding"].astype(jnp.bfloat16)
    emb = jnp.take(table, token_ids, axis=0)                           # (B, L, E) bf16
    L = emb.shape[1]
    pooled = []
    for s, w, b in zip(params["filter_sizes"], params["conv_w"], params["conv_b"]):
        w = w.astype(jnp.bfloat16)
        T = L - s + 1
        conv = sum(
            jnp.einsum("ble,ef->blf", emb[:, j:j + T, :], w[j],
                       preferred_element_type=jnp.float32)
            for j in range(s))
        conv = jnp.maximum(conv + b.reshape(1, 1, -1), 0.0)            # original order
        pooled.append(jnp.max(conv, axis=1))
    feat = jnp.concatenate(pooled, axis=-1)
    return jnp.dot(feat.astype(jnp.bfloat16),
                   params["fc_w"].astype(jnp.bfloat16),
                   preferred_element_type=jnp.float32) + params["fc_b"].reshape(1, -1)


def init_params(key, *, vocab_size, embedding_dim, filter_num, filter_sizes,
                class_num):
    keys = jax.random.split(key, 3 + 2 * len(filter_sizes))
    params = {
        "filter_sizes": tuple(filter_sizes),
        "embedding": 0.1 * jax.random.normal(
            keys[0], (vocab_size, embedding_dim), jnp.float32),
        "conv_w": [],
        "conv_b": [],
    }
    for i, s in enumerate(filter_sizes):
        # PyTorch Conv2d weight is (F, 1, s, E); stored here as (s, E, F).
        params["conv_w"].append(0.1 * jax.random.normal(
            keys[1 + 2 * i], (s, embedding_dim, filter_num), jnp.float32))
        params["conv_b"].append(0.1 * jax.random.normal(
            keys[2 + 2 * i], (1, filter_num), jnp.float32))
    d = len(filter_sizes) * filter_num
    params["fc_w"] = 0.1 * jax.random.normal(keys[-2], (d, class_num), jnp.float32)
    params["fc_b"] = 0.1 * jax.random.normal(keys[-1], (1, class_num), jnp.float32)
    return params


if __name__ == "__main__":
    VOCAB = 50
    EMBED_DIM = 32
    FILTER_NUM = 8
    FILTER_SIZES = (3, 4, 5)
    N_CLASSES = 4
    BATCH = 2
    SEQ_LEN = 16

    key = jax.random.PRNGKey(0)
    k_tok, k_par = jax.random.split(key)

    params = init_params(
        k_par,
        vocab_size=VOCAB,
        embedding_dim=EMBED_DIM,
        filter_num=FILTER_NUM,
        filter_sizes=FILTER_SIZES,
        class_num=N_CLASSES,
    )
    token_ids = jax.random.randint(k_tok, (BATCH, SEQ_LEN), 0, VOCAB)   # (B, L)

    logits = textcnn_forward(token_ids, params)
    jax.block_until_ready(logits)
    assert logits.shape == (BATCH, N_CLASSES)

    ref = textcnn_reference(token_ids, params)
    assert bool(jnp.allclose(logits, ref, atol=1e-3, rtol=1e-3)), (
        "mismatch vs reference")

    print("KERNEL_OK")
</pallas_src>

<mosaic_0001>
module attributes {stable_mosaic.version = 11 : i64} {
  func.func @_textcnn_kernel(%arg0: i32, %arg1: memref<1x1x16xi32, #tpu.memory_space<vmem>>, %arg2: memref<50x32xbf16, #tpu.memory_space<vmem>>, %arg3: memref<96x8xbf16, #tpu.memory_space<vmem>>, %arg4: memref<128x8xbf16, #tpu.memory_space<vmem>>, %arg5: memref<160x8xbf16, #tpu.memory_space<vmem>>, %arg6: memref<1x24xf32, #tpu.memory_space<vmem>>, %arg7: memref<24x4xbf16, #tpu.memory_space<vmem>>, %arg8: memref<1x4xf32, #tpu.memory_space<vmem>>, %arg9: memref<1x1x4xf32, #tpu.memory_space<vmem>>) attributes {dimension_semantics = [#tpu.dimension_semantics<parallel>], iteration_bounds = array<i64: 2>, scalar_prefetch = 0 : i64, scratch_operands = 0 : i64, tpu.core_type = #tpu.core_type<tc>, window_params = [{transform_indices = @transform_0, window_bounds = array<i64: 1, 1, 16>}, {pipeline_mode = #tpu.pipeline_mode<synchronous>, transform_indices = @transform_1, window_bounds = array<i64: 50, 32>}, {pipeline_mode = #tpu.pipeline_mode<synchronous>, transform_indices = @transform_2, window_bounds = array<i64: 96, 8>}, {pipeline_mode = #tpu.pipeline_mode<synchronous>, transform_indices = @transform_3, window_bounds = array<i64: 128, 8>}, {pipeline_mode = #tpu.pipeline_mode<synchronous>, transform_indices = @transform_4, window_bounds = array<i64: 160, 8>}, {pipeline_mode = #tpu.pipeline_mode<synchronous>, transform_indices = @transform_5, window_bounds = array<i64: 1, 24>}, {pipeline_mode = #tpu.pipeline_mode<synchronous>, transform_indices = @transform_6, window_bounds = array<i64: 24, 4>}, {pipeline_mode = #tpu.pipeline_mode<synchronous>, transform_indices = @transform_7, window_bounds = array<i64: 1, 4>}, {transform_indices = @transform_8, window_bounds = array<i64: 1, 1, 4>}]} {
    %c0 = arith.constant 0 : index
    %c0_0 = arith.constant 0 : index
    %c0_1 = arith.constant 0 : index
    %0 = vector.load %arg1[%c0, %c0_0, %c0_1] : memref<1x1x16xi32, #tpu.memory_space<vmem>>, vector<1x1x16xi32>
    %1 = vector.shape_cast %0 : vector<1x1x16xi32> to vector<1x16xi32>
    %2 = tpu.iota {dimensions = array<i32: 2>} : vector<1x16x50xi32>
    %3 = vector.shape_cast %1 : vector<1x16xi32> to vector<1x16x1xi32>
    %4 = vector.broadcast %3 : vector<1x16x1xi32> to vector<1x16x50xi32>
    %5 = arith.cmpi eq, %4, %2 : vector<1x16x50xi32>
    %6 = arith.extui %5 : vector<1x16x50xi1> to vector<1x16x50xi32>
    %7 = arith.sitofp %6 : vector<1x16x50xi32> to vector<1x16x50xf32>
    %8 = arith.truncf %7 : vector<1x16x50xf32> to vector<1x16x50xbf16>
    %9 = vector.shape_cast %8 : vector<1x16x50xbf16> to vector<16x50xbf16>
    %c0_2 = arith.constant 0 : index
    %c0_3 = arith.constant 0 : index
    %10 = vector.load %arg2[%c0_2, %c0_3] : memref<50x32xbf16, #tpu.memory_space<vmem>>, vector<50x32xbf16>
    %cst = arith.constant dense<0.000000e+00> : vector<16x32xf32>
    %11 = tpu.matmul %9, %10, %cst {dimension_numbers = #tpu.dot_dimension_numbers<[1], [0], [0], [1], [0, 0, 1, 1], [], []>} : vector<16x50xbf16>, vector<50x32xbf16>, vector<16x32xf32> -> vector<16x32xf32>
    %12 = vector.shape_cast %11 : vector<16x32xf32> to vector<1x16x32xf32>
    %13 = arith.truncf %12 : vector<1x16x32xf32> to vector<1x16x32xbf16>
    %14 = vector.extract_strided_slice %13 {offsets = [0, 0, 0], sizes = [1, 14, 32], strides = [1, 1, 1]} : vector<1x16x32xbf16> to vector<1x14x32xbf16>
    %15 = vector.extract_strided_slice %13 {offsets = [0, 1, 0], sizes = [1, 14, 32], strides = [1, 1, 1]} : vector<1x16x32xbf16> to vector<1x14x32xbf16>
    %16 = vector.extract_strided_slice %13 {offsets = [0, 2, 0], sizes = [1, 14, 32], strides = [1, 1, 1]} : vector<1x16x32xbf16> to vector<1x14x32xbf16>
    %17 = tpu.concatenate %14, %15, %16 in 2 : vector<1x14x32xbf16>, vector<1x14x32xbf16>, vector<1x14x32xbf16> -> vector<1x14x96xbf16>
    %18 = vector.shape_cast %17 : vector<1x14x96xbf16> to vector<14x96xbf16>
    %c0_4 = arith.constant 0 : index
    %c0_5 = arith.constant 0 : index
    %19 = vector.load %arg3[%c0_4, %c0_5] : memref<96x8xbf16, #tpu.memory_space<vmem>>, vector<96x8xbf16>
    %cst_6 = arith.constant dense<0.000000e+00> : vector<14x8xf32>
    %20 = tpu.matmul %18, %19, %cst_6 {dimension_numbers = #tpu.dot_dimension_numbers<[1], [0], [0], [1], [0, 0, 1, 1], [], []>} : vector<14x96xbf16>, vector<96x8xbf16>, vector<14x8xf32> -> vector<14x8xf32>
    %21 = vector.shape_cast %20 : vector<14x8xf32> to vector<1x14x8xf32>
    %cst_7 = arith.constant dense<0xFF800000> : vector<1x8xf32>
    %22 = vector.multi_reduction <maximumf>, %21, %cst_7 [1] : vector<1x14x8xf32> to vector<1x8xf32>
    %23 = vector.extract_strided_slice %13 {offsets = [0, 0, 0], sizes = [1, 13, 32], strides = [1, 1, 1]} : vector<1x16x32xbf16> to vector<1x13x32xbf16>
    %24 = vector.extract_strided_slice %13 {offsets = [0, 1, 0], sizes = [1, 13, 32], strides = [1, 1, 1]} : vector<1x16x32xbf16> to vector<1x13x32xbf16>
    %25 = vector.extract_strided_slice %13 {offsets = [0, 2, 0], sizes = [1, 13, 32], strides = [1, 1, 1]} : vector<1x16x32xbf16> to vector<1x13x32xbf16>
    %26 = vector.extract_strided_slice %13 {offsets = [0, 3, 0], sizes = [1, 13, 32], strides = [1, 1, 1]} : vector<1x16x32xbf16> to vector<1x13x32xbf16>
    %27 = tpu.concatenate %23, %24, %25, %26 in 2 : vector<1x13x32xbf16>, vector<1x13x32xbf16>, vector<1x13x32xbf16>, vector<1x13x32xbf16> -> vector<1x13x128xbf16>
    %28 = vector.shape_cast %27 : vector<1x13x128xbf16> to vector<13x128xbf16>
    %c0_8 = arith.constant 0 : index
    %c0_9 = arith.constant 0 : index
    %29 = vector.load %arg4[%c0_8, %c0_9] : memref<128x8xbf16, #tpu.memory_space<vmem>>, vector<128x8xbf16>
    %cst_10 = arith.constant dense<0.000000e+00> : vector<13x8xf32>
    %30 = tpu.matmul %28, %29, %cst_10 {dimension_numbers = #tpu.dot_dimension_numbers<[1], [0], [0], [1], [0, 0, 1, 1], [], []>} : vector<13x128xbf16>, vector<128x8xbf16>, vector<13x8xf32> -> vector<13x8xf32>
    %31 = vector.shape_cast %30 : vector<13x8xf32> to vector<1x13x8xf32>
    %cst_11 = arith.constant dense<0xFF800000> : vector<1x8xf32>
    %32 = vector.multi_reduction <maximumf>, %31, %cst_11 [1] : vector<1x13x8xf32> to vector<1x8xf32>
    %33 = vector.extract_strided_slice %13 {offsets = [0, 0, 0], sizes = [1, 12, 32], strides = [1, 1, 1]} : vector<1x16x32xbf16> to vector<1x12x32xbf16>
    %34 = vector.extract_strided_slice %13 {offsets = [0, 1, 0], sizes = [1, 12, 32], strides = [1, 1, 1]} : vector<1x16x32xbf16> to vector<1x12x32xbf16>
    %35 = vector.extract_strided_slice %13 {offsets = [0, 2, 0], sizes = [1, 12, 32], strides = [1, 1, 1]} : vector<1x16x32xbf16> to vector<1x12x32xbf16>
    %36 = vector.extract_strided_slice %13 {offsets = [0, 3, 0], sizes = [1, 12, 32], strides = [1, 1, 1]} : vector<1x16x32xbf16> to vector<1x12x32xbf16>
    %37 = vector.extract_strided_slice %13 {offsets = [0, 4, 0], sizes = [1, 12, 32], strides = [1, 1, 1]} : vector<1x16x32xbf16> to vector<1x12x32xbf16>
    %38 = tpu.concatenate %33, %34, %35, %36, %37 in 2 : vector<1x12x32xbf16>, vector<1x12x32xbf16>, vector<1x12x32xbf16>, vector<1x12x32xbf16>, vector<1x12x32xbf16> -> vector<1x12x160xbf16>
    %39 = vector.shape_cast %38 : vector<1x12x160xbf16> to vector<12x160xbf16>
    %c0_12 = arith.constant 0 : index
    %c0_13 = arith.constant 0 : index
    %40 = vector.load %arg5[%c0_12, %c0_13] : memref<160x8xbf16, #tpu.memory_space<vmem>>, vector<160x8xbf16>
    %cst_14 = arith.constant dense<0.000000e+00> : vector<12x8xf32>
    %41 = tpu.matmul %39, %40, %cst_14 {dimension_numbers = #tpu.dot_dimension_numbers<[1], [0], [0], [1], [0, 0, 1, 1], [], []>} : vector<12x160xbf16>, vector<160x8xbf16>, vector<12x8xf32> -> vector<12x8xf32>
    %42 = vector.shape_cast %41 : vector<12x8xf32> to vector<1x12x8xf32>
    %cst_15 = arith.constant dense<0xFF800000> : vector<1x8xf32>
    %43 = vector.multi_reduction <maximumf>, %42, %cst_15 [1] : vector<1x12x8xf32> to vector<1x8xf32>
    %44 = tpu.concatenate %22, %32, %43 in 1 : vector<1x8xf32>, vector<1x8xf32>, vector<1x8xf32> -> vector<1x24xf32>
    %c0_16 = arith.constant 0 : index
    %c0_17 = arith.constant 0 : index
    %45 = vector.load %arg6[%c0_16, %c0_17] : memref<1x24xf32, #tpu.memory_space<vmem>>, vector<1x24xf32>
    %46 = arith.addf %44, %45 : vector<1x24xf32>
    %cst_18 = arith.constant 0.000000e+00 : f32
    %47 = vector.broadcast %cst_18 : f32 to vector<1x24xf32>
    %48 = arith.maximumf %46, %47 : vector<1x24xf32>
    %49 = arith.truncf %48 : vector<1x24xf32> to vector<1x24xbf16>
    %c0_19 = arith.constant 0 : index
    %c0_20 = arith.constant 0 : index
    %50 = vector.load %arg7[%c0_19, %c0_20] : memref<24x4xbf16, #tpu.memory_space<vmem>>, vector<24x4xbf16>
    %cst_21 = arith.constant dense<0.000000e+00> : vector<1x4xf32>
    %51 = tpu.matmul %49, %50, %cst_21 {dimension_numbers = #tpu.dot_dimension_numbers<[1], [0], [0], [1], [0, 0, 1, 1], [], []>} : vector<1x24xbf16>, vector<24x4xbf16>, vector<1x4xf32> -> vector<1x4xf32>
    %c0_22 = arith.constant 0 : index
    %c0_23 = arith.constant 0 : index
    %52 = vector.load %arg8[%c0_22, %c0_23] : memref<1x4xf32, #tpu.memory_space<vmem>>, vector<1x4xf32>
    %53 = arith.addf %51, %52 : vector<1x4xf32>
    %54 = vector.shape_cast %53 : vector<1x4xf32> to vector<1x1x4xf32>
    %c0_24 = arith.constant 0 : index
    %c0_25 = arith.constant 0 : index
    %c0_26 = arith.constant 0 : index
    %55 = vector.load %arg9[%c0_24, %c0_25, %c0_26] : memref<1x1x4xf32, #tpu.memory_space<vmem>>, vector<1x1x4xf32>
    tpu.vector_store %arg9[%c0_24, %c0_25, %c0_26], %54 {strides = array<i32>} : memref<1x1x4xf32, #tpu.memory_space<vmem>>, vector<1x1x4xf32>,
    return
  }
  func.func @transform_0(%arg0: i32) -> (i32, i32, i32) {
    %c0_i32 = arith.constant 0 : i32
    %c0_i32_0 = arith.constant 0 : i32
    %c0_i32_1 = arith.constant 0 : i32
    return %arg0, %c0_i32, %c0_i32_0 : i32, i32, i32
  }
  func.func @transform_1(%arg0: i32) -> (i32, i32) {
    %c0_i32 = arith.constant 0 : i32
    %c0_i32_0 = arith.constant 0 : i32
    %c0_i32_1 = arith.constant 0 : i32
    return %c0_i32, %c0_i32_0 : i32, i32
  }
  func.func @transform_2(%arg0: i32) -> (i32, i32) {
    %c0_i32 = arith.constant 0 : i32
    %c0_i32_0 = arith.constant 0 : i32
    %c0_i32_1 = arith.constant 0 : i32
    return %c0_i32, %c0_i32_0 : i32, i32
  }
  func.func @transform_3(%arg0: i32) -> (i32, i32) {
    %c0_i32 = arith.constant 0 : i32
    %c0_i32_0 = arith.constant 0 : i32
    %c0_i32_1 = arith.constant 0 : i32
    return %c0_i32, %c0_i32_0 : i32, i32
  }
  func.func @transform_4(%arg0: i32) -> (i32, i32) {
    %c0_i32 = arith.constant 0 : i32
    %c0_i32_0 = arith.constant 0 : i32
    %c0_i32_1 = arith.constant 0 : i32
    return %c0_i32, %c0_i32_0 : i32, i32
  }
  func.func @transform_5(%arg0: i32) -> (i32, i32) {
    %c0_i32 = arith.constant 0 : i32
    %c0_i32_0 = arith.constant 0 : i32
    %c0_i32_1 = arith.constant 0 : i32
    return %c0_i32, %c0_i32_0 : i32, i32
  }
  func.func @transform_6(%arg0: i32) -> (i32, i32) {
    %c0_i32 = arith.constant 0 : i32
    %c0_i32_0 = arith.constant 0 : i32
    %c0_i32_1 = arith.constant 0 : i32
    return %c0_i32, %c0_i32_0 : i32, i32
  }
  func.func @transform_7(%arg0: i32) -> (i32, i32) {
    %c0_i32 = arith.constant 0 : i32
    %c0_i32_0 = arith.constant 0 : i32
    %c0_i32_1 = arith.constant 0 : i32
    return %c0_i32, %c0_i32_0 : i32, i32
  }
  func.func @transform_8(%arg0: i32) -> (i32, i32, i32) {
    %c0_i32 = arith.constant 0 : i32
    %c0_i32_0 = arith.constant 0 : i32
    %c0_i32_1 = arith.constant 0 : i32
    return %arg0, %c0_i32, %c0_i32_0 : i32, i32, i32
  }
}

</mosaic_0001>

<llo_original>
// kernel: tpu_custom_call.1
$region0: #{tpu_custom_call.1}
  #allocation0 [shape = 'u32[]', space=smem, size = 0x4, offset = 0x4, fixed_abs, tag = 'smem constant byte address 0x4 - core index']
  #allocation1 [shape = 'u32[144,128]{1,0:T(1,128)}', space=vmem, size = 0x12000, scoped, tag = 'internal scratch']
  %s0 = inlined_call_operand.vmem [shape: s32[2,1,16], index: 0, kind: input, shape index: {}]
  %s1 = inlined_call_operand.vmem [shape: bf16[50,32], index: 1, kind: input, shape index: {}]
  %s2 = inlined_call_operand.vmem [shape: bf16[96,8], index: 2, kind: input, shape index: {}]
  %s3 = inlined_call_operand.vmem [shape: bf16[128,8], index: 3, kind: input, shape index: {}]
  %s4 = inlined_call_operand.vmem [shape: bf16[160,8], index: 4, kind: input, shape index: {}]
  %s5 = inlined_call_operand.vmem [shape: f32[1,24], index: 5, kind: input, shape index: {}]
  %s6 = inlined_call_operand.vmem [shape: bf16[24,4], index: 6, kind: input, shape index: {}]
  %s7 = inlined_call_operand.vmem [shape: f32[1,4], index: 7, kind: input, shape index: {}]
  %s8 = inlined_call_operand.hbm [shape: f32[2,1,4], index: 8, kind: output, shape index: {}]
  %s9 = sld [smem:[#allocation0]]
  $region65: #{tpu_custom_call.1} parent=0
    _
  %s11 = ssub.s32 1, %s9
  %s12 = scalar_select 0, %s11, %s9
  $region1: #{tpu_custom_call.1} parent=0
    #allocation2 [shape = 'u8[1024]{0}', space=vmem, size = 0x400, scoped, tag = 'output window, operand 0']
    #allocation3 [shape = 's32[2]{0}', space=sflag, size = 0x8, scoped, tag = 'scoped memory for tpu_custom_call.1']
    %13 = vsyncpa [#allocation3], 0
    %s14 = scalar_lea.sflag [#allocation3], 1
    %15 = vsyncpa %s14, 0
    loop: start=0, step=1, limit=4
    $region2: #{tpu_custom_call.1} parent=1 // loop_pre_header
      _
    $region3: #{tpu_custom_call.1} parent=1 // loop_header
      %s17 = sphi 0, %s21
      %p18 = scmp.ge.s32.totalorder %s17, 4
      %s27 = sphi 0, %s29
      %s30 = sphi 0, %s27
      %s31 = sphi 0, %s30
      %s47 = sphi 0, %s31
      %s51 = sphi 0, %s51
      %s53 = sphi 0, %s51
      %s54 = sphi 0, %s53
      %s68 = sphi 0, %s54
      %s72 = sphi 0, %s72
      %s74 = sphi 0, %s72
      %s75 = sphi 0, %s74
      %s89 = sphi 0, %s75
      %s93 = sphi 0, %s93
      %s95 = sphi 0, %s93
      %s96 = sphi 0, %s95
      %s110 = sphi 0, %s96
      %s114 = sphi 0, %s114
      %s116 = sphi 0, %s114
      %s117 = sphi 0, %s116
      %s131 = sphi 0, %s117
      %s135 = sphi 0, %s135
      %s137 = sphi 0, %s135
      %s138 = sphi 0, %s137
      %s152 = sphi 0, %s138
      %s156 = sphi 0, %s156
      %s158 = sphi 0, %s156
      %s159 = sphi 0, %s158
      %s173 = sphi 0, %s159
      %s177 = sphi 0, %s177
      %s179 = sphi 0, %s177
      %s180 = sphi 0, %s179
      %s194 = sphi 0, %s180
      %s200 = sphi 0, %s202
      %s203 = sphi 0, %s200
      %s204 = sphi 0, %s203
      %s220 = sphi 0, %s204
    $region4: #{tpu_custom_call.1} parent=1 // loop_header_branch
      %20 = sbr.rel (%p18) target = $region8
    $region5: #{tpu_custom_call.1} parent=1 // loop_body
      %s22 = ssub.s32 %s17, 1
      %s23 = ssub.s32 %s17, 2
      %s24 = sadd.s32 %s17, 1
      %s25 = ssub.s32 %s17, %s24
      %p26 = scmp.eq.s32.totalorder %s25, 0
      %s28 = sadd.s32 %s27, 1
      %s29 = scalar_select %p26, %s27, %s28
      %p32 = pneg %p26
      %p33 = scmp.eq.s32.totalorder %s17, 1
      %p34 = por %p32, %p33
      %p35 = scmp.ne.s32.totalorder %s27, %s30
      %p36 = scmp.eq.s32.totalorder %s17, 0
      %p37 = por %p35, %p36
      %p38 = scmp.ne.s32.totalorder %s27, %s30
      %p39 = scmp.eq.s32.totalorder %s22, 1
      %p40 = por %p38, %p39
      %p41 = scmp.ne.s32.totalorder %s30, %s31
      %p42 = scmp.eq.s32.totalorder %s22, 0
      %p43 = por %p41, %p42
      %p44 = scmp.ne.s32.totalorder %s30, %s31
      %p45 = scmp.eq.s32.totalorder %s23, 1
      %p46 = por %p44, %p45
      %p48 = scmp.ne.s32.totalorder %s31, %s47
      %p49 = scmp.eq.s32.totalorder %s23, 0
      %p50 = por %p48, %p49
      %s52 = sadd.s32 %s51, 1
      %p55 = scmp.eq.s32.totalorder %s17, 1
      %p56 = scmp.ne.s32.totalorder %s51, %s53
      %p57 = scmp.eq.s32.totalorder %s17, 0
      %p58 = por %p56, %p57
      %p59 = scmp.ne.s32.totalorder %s51, %s53
      %p60 = scmp.eq.s32.totalorder %s22, 1
      %p61 = por %p59, %p60
      %p62 = scmp.ne.s32.totalorder %s53, %s54
      %p63 = scmp.eq.s32.totalorder %s22, 0
      %p64 = por %p62, %p63
      %p65 = scmp.ne.s32.totalorder %s53, %s54
      %p66 = scmp.eq.s32.totalorder %s23, 1
      %p67 = por %p65, %p66
      %p69 = scmp.ne.s32.totalorder %s54, %s68
      %p70 = scmp.eq.s32.totalorder %s23, 0
      %p71 = por %p69, %p70
      %s73 = sadd.s32 %s72, 1
      %p76 = scmp.eq.s32.totalorder %s17, 1
      %p77 = scmp.ne.s32.totalorder %s72, %s74
      %p78 = scmp.eq.s32.totalorder %s17, 0
      %p79 = por %p77, %p78
      %p80 = scmp.ne.s32.totalorder %s72, %s74
      %p81 = scmp.eq.s32.totalorder %s22, 1
      %p82 = por %p80, %p81
      %p83 = scmp.ne.s32.totalorder %s74, %s75
      %p84 = scmp.eq.s32.totalorder %s22, 0
      %p85 = por %p83, %p84
      %p86 = scmp.ne.s32.totalorder %s74, %s75
      %p87 = scmp.eq.s32.totalorder %s23, 1
      %p88 = por %p86, %p87
      %p90 = scmp.ne.s32.totalorder %s75, %s89
      %p91 = scmp.eq.s32.totalorder %s23, 0
      %p92 = por %p90, %p91
      %s94 = sadd.s32 %s93, 1
      %p97 = scmp.eq.s32.totalorder %s17, 1
      %p98 = scmp.ne.s32.totalorder %s93, %s95
      %p99 = scmp.eq.s32.totalorder %s17, 0
      %p100 = por %p98, %p99
      %p101 = scmp.ne.s32.totalorder %s93, %s95
      %p102 = scmp.eq.s32.totalorder %s22, 1
      %p103 = por %p101, %p102
      %p104 = scmp.ne.s32.totalorder %s95, %s96
      %p105 = scmp.eq.s32.totalorder %s22, 0
      %p106 = por %p104, %p105
      %p107 = scmp.ne.s32.totalorder %s95, %s96
      %p108 = scmp.eq.s32.totalorder %s23, 1
      %p109 = por %p107, %p108
      %p111 = scmp.ne.s32.totalorder %s96, %s110
      %p112 = scmp.eq.s32.totalorder %s23, 0
      %p113 = por %p111, %p112
      %s115 = sadd.s32 %s114, 1
      %p118 = scmp.eq.s32.totalorder %s17, 1
      %p119 = scmp.ne.s32.totalorder %s114, %s116
      %p120 = scmp.eq.s32.totalorder %s17, 0
      %p121 = por %p119, %p120
      %p122 = scmp.ne.s32.totalorder %s114, %s116
      %p123 = scmp.eq.s32.totalorder %s22, 1
      %p124 = por %p122, %p123
      %p125 = scmp.ne.s32.totalorder %s116, %s117
      %p126 = scmp.eq.s32.totalorder %s22, 0
      %p127 = por %p125, %p126
      %p128 = scmp.ne.s32.totalorder %s116, %s117
      %p129 = scmp.eq.s32.totalorder %s23, 1
      %p130 = por %p128, %p129
      %p132 = scmp.ne.s32.totalorder %s117, %s131
      %p133 = scmp.eq.s32.totalorder %s23, 0
      %p134 = por %p132, %p133
      %s136 = sadd.s32 %s135, 1
      %p139 = scmp.eq.s32.totalorder %s17, 1
      %p140 = scmp.ne.s32.totalorder %s135, %s137
      %p141 = scmp.eq.s32.totalorder %s17, 0
      %p142 = por %p140, %p141
      %p143 = scmp.ne.s32.totalorder %s135, %s137
      %p144 = scmp.eq.s32.totalorder %s22, 1
      %p145 = por %p143, %p144
      %p146 = scmp.ne.s32.totalorder %s137, %s138
      %p147 = scmp.eq.s32.totalorder %s22, 0
      %p148 = por %p146, %p147
      %p149 = scmp.ne.s32.totalorder %s137, %s138
      %p150 = scmp.eq.s32.totalorder %s23, 1
      %p151 = por %p149, %p150
      %p153 = scmp.ne.s32.totalorder %s138, %s152
      %p154 = scmp.eq.s32.totalorder %s23, 0
      %p155 = por %p153, %p154
      %s157 = sadd.s32 %s156, 1
      %p160 = scmp.eq.s32.totalorder %s17, 1
      %p161 = scmp.ne.s32.totalorder %s156, %s158
      %p162 = scmp.eq.s32.totalorder %s17, 0
      %p163 = por %p161, %p162
      %p164 = scmp.ne.s32.totalorder %s156, %s158
      %p165 = scmp.eq.s32.totalorder %s22, 1
      %p166 = por %p164, %p165
      %p167 = scmp.ne.s32.totalorder %s158, %s159
      %p168 = scmp.eq.s32.totalorder %s22, 0
      %p169 = por %p167, %p168
      %p170 = scmp.ne.s32.totalorder %s158, %s159
      %p171 = scmp.eq.s32.totalorder %s23, 1
      %p172 = por %p170, %p171
      %p174 = scmp.ne.s32.totalorder %s159, %s173
      %p175 = scmp.eq.s32.totalorder %s23, 0
      %p176 = por %p174, %p175
      %s178 = sadd.s32 %s177, 1
      %p181 = scmp.eq.s32.totalorder %s17, 1
      %p182 = scmp.ne.s32.totalorder %s177, %s179
      %p183 = scmp.eq.s32.totalorder %s17, 0
      %p184 = por %p182, %p183
      %p185 = scmp.ne.s32.totalorder %s177, %s179
      %p186 = scmp.eq.s32.totalorder %s22, 1
      %p187 = por %p185, %p186
      %p188 = scmp.ne.s32.totalorder %s179, %s180
      %p189 = scmp.eq.s32.totalorder %s22, 0
      %p190 = por %p188, %p189
      %p191 = scmp.ne.s32.totalorder %s179, %s180
      %p192 = scmp.eq.s32.totalorder %s23, 1
      %p193 = por %p191, %p192
      %p195 = scmp.ne.s32.totalorder %s180, %s194
      %p196 = scmp.eq.s32.totalorder %s23, 0
      %p197 = por %p195, %p196
      %s198 = ssub.s32 %s17, %s24
      %p199 = scmp.eq.s32.totalorder %s198, 0
      %s201 = sadd.s32 %s200, 1
      %s202 = scalar_select %p199, %s200, %s201
      %p205 = pneg %p199
      %p206 = scmp.eq.s32.totalorder %s17, 1
      %p207 = por %p205, %p206
      %p208 = scmp.ne.s32.totalorder %s200, %s203
      %p209 = scmp.eq.s32.totalorder %s17, 0
      %p210 = por %p208, %p209
      %p211 = scmp.ne.s32.totalorder %s200, %s203
      %p212 = scmp.eq.s32.totalorder %s22, 1
      %p213 = por %p211, %p212
      %p214 = scmp.ne.s32.totalorder %s203, %s204
      %p215 = scmp.eq.s32.totalorder %s22, 0
      %p216 = por %p214, %p215
      %p217 = scmp.ne.s32.totalorder %s203, %s204
      %p218 = scmp.eq.s32.totalorder %s23, 1
      %p219 = por %p217, %p218
      %p221 = scmp.ne.s32.totalorder %s204, %s220
      %p222 = scmp.eq.s32.totalorder %s23, 0
      %p223 = por %p221, %p222
      %p224 = scmp.le.s32.totalorder 1, %s17
      %p225 = scmp.lt.s32.totalorder %s17, 3
      %p226 = pnand %p224, %p225
      %p227 = pneg %p226
      // Predicated region
      $region9: #{tpu_custom_call.1} parent=5 // pred_check
        _
      $region10: #{tpu_custom_call.1} parent=5 // pred_check_branch
        %229 = sbr.rel (%p226) target = $region12
      $region11: #{tpu_custom_call.1} parent=5 // pred_region
        %s230 = ssub.s32 %s17, 1
        // Predicated region
        $region13: #{tpu_custom_call.1} parent=11 // pred_check
          %p231 = pneg %p64
        $region14: #{tpu_custom_call.1} parent=11 // pred_check_branch
          %233 = sbr.rel (%p231) target = $region16
        $region15: #{tpu_custom_call.1} parent=11 // pred_region
          _
        $region16: #{tpu_custom_call.1} parent=11 // pred_fallthru
          _
        // Predicated region
        $region17: #{tpu_custom_call.1} parent=11 // pred_check
          %p234 = pneg %p85
        $region18: #{tpu_custom_call.1} parent=11 // pred_check_branch
          %236 = sbr.rel (%p234) target = $region20
        $region19: #{tpu_custom_call.1} parent=11 // pred_region
          _
        $region20: #{tpu_custom_call.1} parent=11 // pred_fallthru
          _
        // Predicated region
        $region21: #{tpu_custom_call.1} parent=11 // pred_check
          %p237 = pneg %p106
        $region22: #{tpu_custom_call.1} parent=11 // pred_check_branch
          %239 = sbr.rel (%p237) target = $region24
        $region23: #{tpu_custom_call.1} parent=11 // pred_region
          _
        $region24: #{tpu_custom_call.1} parent=11 // pred_fallthru
          _
        // Predicated region
        $region25: #{tpu_custom_call.1} parent=11 // pred_check
          %p240 = pneg %p127
        $region26: #{tpu_custom_call.1} parent=11 // pred_check_branch
          %242 = sbr.rel (%p240) target = $region28
        $region27: #{tpu_custom_call.1} parent=11 // pred_region
          _
        $region28: #{tpu_custom_call.1} parent=11 // pred_fallthru
          _
        // Predicated region
        $region29: #{tpu_custom_call.1} parent=11 // pred_check
          %p243 = pneg %p148
        $region30: #{tpu_custom_call.1} parent=11 // pred_check_branch
          %245 = sbr.rel (%p243) target = $region32
        $region31: #{tpu_custom_call.1} parent=11 // pred_region
          _
        $region32: #{tpu_custom_call.1} parent=11 // pred_fallthru
          _
        // Predicated region
        $region33: #{tpu_custom_call.1} parent=11 // pred_check
          %p246 = pneg %p169
        $region34: #{tpu_custom_call.1} parent=11 // pred_check_branch
          %248 = sbr.rel (%p246) target = $region36
        $region35: #{tpu_custom_call.1} parent=11 // pred_region
          _
        $region36: #{tpu_custom_call.1} parent=11 // pred_fallthru
          _
        // Predicated region
        $region37: #{tpu_custom_call.1} parent=11 // pred_check
          %p249 = pneg %p190
        $region38: #{tpu_custom_call.1} parent=11 // pred_check_branch
          %251 = sbr.rel (%p249) target = $region40
        $region39: #{tpu_custom_call.1} parent=11 // pred_region
          _
        $region40: #{tpu_custom_call.1} parent=11 // pred_fallthru
          _
      $region12: #{tpu_custom_call.1} parent=5 // pred_fallthru
        _
      %p252 = scmp.lt.s32.totalorder %s17, 2
      // Predicated region
      $region41: #{tpu_custom_call.1} parent=5 // pred_check
        %p253 = pneg %p252
      $region42: #{tpu_custom_call.1} parent=5 // pred_check_branch
        %255 = sbr.rel (%p253) target = $region44
      $region43: #{tpu_custom_call.1} parent=5 // pred_region
        // Predicated region
        $region45: #{tpu_custom_call.1} parent=43 // pred_check
          %p256 = pneg %p37
        $region46: #{tpu_custom_call.1} parent=43 // pred_check_branch
          %258 = sbr.rel (%p256) target = $region48
        $region47: #{tpu_custom_call.1} parent=43 // pred_region
          %p259 = scmp.lt.s32.totalorder %s17, 1
          %s260 = scalar_select %p259, %s17, 1
          %s261 = scalar_lea.vmem %s0, %s260
        $region48: #{tpu_custom_call.1} parent=43 // pred_fallthru
          _
      $region44: #{tpu_custom_call.1} parent=5 // pred_fallthru
        _
      %p262 = scmp.le.s32.totalorder 1, %s17
      %p263 = scmp.lt.s32.totalorder %s17, 3
      %p264 = pnand %p262, %p263
      %p265 = pneg %p264
      // Predicated region
      $region49: #{tpu_custom_call.1} parent=5 // pred_check
        _
      $region50: #{tpu_custom_call.1} parent=5 // pred_check_branch
        %267 = sbr.rel (%p264) target = $region52
      $region51: #{tpu_custom_call.1} parent=5 // pred_region
        %s268 = ssub.s32 %s17, 1
        %p269 = scmp.lt.s32.totalorder %s22, 1
        %s270 = scalar_select %p269, %s22, 1
        %s271 = scalar_lea.vmem %s0, %s270
        %p272 = pneg %p43
        %p273 = pneg %p40
        %p274 = pneg %p64
        %p275 = pneg %p61
        %p276 = pneg %p85
        %p277 = pneg %p82
        %p278 = pneg %p106
        %p279 = pneg %p103
        %p280 = pneg %p127
        %p281 = pneg %p124
        %p282 = pneg %p148
        %p283 = pneg %p145
        %p284 = pneg %p169
        %p285 = pneg %p166
        %p286 = pneg %p190
        %p287 = pneg %p187
        %p288 = pneg %p216
        %p289 = pneg %p213
        %s290 = sand.u32 %s203, 1
        %s291 = scalar_lea.sflag [#allocation3], %s290
        %s292 = sand.u32 %s203, 1
        %s293 = scalar_lea.vmem [#allocation2], %s292
        %p294 = scmp.lt.s32.totalorder %s22, 1
        %s295 = scalar_select %p294, %s22, 1
        %s296 = scalar_lea.vmem %s0, %s295
        %v298 = vld [vmem:[%s296] sm:$0x1]
        %v299 = vlaneseq
        %v300 = vand.u32 %v299, 127
        %v301 = vlaneseq
        %v302 = vshrl.u32 %v301, 7
        %v303 = vsub.s32 0, %v302
        %v304 = vrot.slane %v298, %v303
        %306 = vbcast.lane.b32.xlu0 %v304, 256
        %v307 = vpop.permute.xlu0 %306
        %s309 = sor.u32 256, 8
        %310 = vbcast.lane.b32.xlu0 %v304, %s309
        %v311 = vpop.permute.xlu0 %310
        %vm312 = vcmp.eq.s32.totalorder %v307, %v300
        %vm313 = vcmp.eq.s32.totalorder %v311, %v300
        %v314 = vsel %vm312, 1, 0
        %v315 = vsel %vm313, 1, 0
        %v316 = vcvt.s32.f32 %v314
        %v317 = vcvt.s32.f32 %v315
        %v318 = vpack.c.bf16 %v317, %v316
        %v319 = vld [vmem:[%s1] sm:$0xf]
        %v320 = vld [vmem:[%s1 + $0x4] sm:$0xf]
        %v321 = vld [vmem:[%s1 + $0x8] sm:$0xf]
        %v322 = vld [vmem:[%s1 + $0xc] sm:$0xf]
        %v323 = vld [vmem:[%s1 + $0x10] sm:$0xf]
        %v324 = vld [vmem:[%s1 + $0x14] sm:$0xf]
        %v325 = vld [vmem:[%s1 + $0x18] sm:$0x1]
        %v333 = vunpack.c.l.b16 %v319
        %v334 = vunpack.c.l.b16 %v320
        %v335 = vunpack.c.l.b16 %v321
        %v336 = vunpack.c.l.b16 %v322
        %v337 = vunpack.c.l.b16 %v323
        %v338 = vunpack.c.l.b16 %v324
        %v339 = vunpack.c.l.b16 %v325
        %v340 = vpack.c.b16 %v334, %v333
        %v341 = vpack.c.b16 %v336, %v335
        %v342 = vpack.c.b16 %v338, %v337
        %v343 = vpack.c.b16 %v339, %v339
        %vm347 = vcmask 408576
        %v349 = vsel %vm347, %v318, 0
        %vm351 = vcmask 1040384
        %v353 = vsel %vm351, %v343, 0
        %355 = vmatprep.subr.bf16.mxu0 0
        %356 = vmatpush1.bf16.msra.mxu0 %v340
        %357 = vmatprep.subr.bf16.mxu0 0
        %358 = vmatpush1.bf16.msra.mxu0 %v341
        %359 = vmatprep.subr.bf16.mxu0 0
        %360 = vmatpush1.bf16.msra.mxu0 %v342
        %361 = vmatprep.subr.bf16.mxu0 0
        %362 = vmatpush1.bf16.msra.mxu0 %v353
        %363 = vmatprep.subr.bf16.mxu0 0
        %364 = vmatpush1.bf16.msra.mxu0 0
        %365 = vmatprep.subr.bf16.mxu0 0
        %366 = vmatpush1.bf16.msra.mxu0 0
        %367 = vmatprep.subr.bf16.mxu0 0
        %368 = vmatpush1.bf16.msra.mxu0 0
        %369 = vmatprep.subr.bf16.mxu0 0
        %370 = vmatpush1.bf16.msra.mxu0 0
        %371 = vmatprep.subr.bf16.mxu0 0
        %372 = vmatpush1.bf16.msra.mxu0 0
        %373 = vmatprep.subr.bf16.mxu0 0
        %374 = vmatpush1.bf16.msra.mxu0 0
        %375 = vmatprep.subr.bf16.mxu0 0
        %376 = vmatpush1.bf16.msra.mxu0 0
        %377 = vmatprep.subr.bf16.mxu0 0
        %378 = vmatpush1.bf16.msra.mxu0 0
        %379 = vmatprep.subr.bf16.mxu0 0
        %380 = vmatpush1.bf16.msra.mxu0 0
        %381 = vmatprep.subr.bf16.mxu0 0
        %382 = vmatpush1.bf16.msra.mxu0 0
        %383 = vmatprep.subr.bf16.mxu0 0
        %384 = vmatpush1.bf16.msra.mxu0 0
        %385 = vmatprep.subr.bf16.mxu0 0
        %386 = vmatpush1.bf16.msra.mxu0 0
        %387 = vmatprep.mubr.bf16.mxu0 0
        %388 = vmatmul.mubr.bf16.gmra.mrb[0].mxu0 %v349
        %v389 = vpop.f32.mrb[0].mxu0
        %v390 = vadd.f32 0.0, %v389
        %v391 = vpop.f32.mrb[0].mxu0
        %v392 = vpop.f32.mrb[0].mxu0
        %v393 = vadd.f32 0.0, %v392
        %v394 = vpop.f32.mrb[0].mxu0
        %395 = vdwg.mxu0
        %v396 = vpack.c.bf16 %v393, %v390
        %v398 = vshrl.u32 %v396, 16
        %v400 = vshll.u32 %v396, 16
        %v402 = vrot.slane %v400, 1
        %v403 = vor.u32 %v398, %v402
        %404 = vrot.lane.b32.xlu0 %v403, 32
        %v405 = vpop.permute.xlu0 %404
        %v407 = vrot.slane %v396, 1
        %408 = vrot.lane.b32.xlu0 %v407, 64
        %v409 = vpop.permute.xlu0 %408
        %vm410 = vcmask 261120
        %v412 = vsel %vm410, %v396, %v405
        %vm413 = vcmask 523264
        %v415 = vsel %vm413, %v412, %v409
        %v416 = vld [vmem:[%s2] sm:$0xf]
        %v417 = vld [vmem:[%s2 + $0x4] sm:$0xf]
        %v418 = vld [vmem:[%s2 + $0x8] sm:$0xf]
        %v419 = vld [vmem:[%s2 + $0xc] sm:$0xf]
        %v420 = vld [vmem:[%s2 + $0x10] sm:$0xf]
        %v421 = vld [vmem:[%s2 + $0x14] sm:$0xf]
        %v422 = vld [vmem:[%s2 + $0x18] sm:$0xf]
        %v423 = vld [vmem:[%s2 + $0x1c] sm:$0xf]
        %v424 = vld [vmem:[%s2 + $0x20] sm:$0xf]
        %v425 = vld [vmem:[%s2 + $0x24] sm:$0xf]
        %v426 = vld [vmem:[%s2 + $0x28] sm:$0xf]
        %v427 = vld [vmem:[%s2 + $0x2c] sm:$0xf]
        %v440 = vunpack.c.l.b16 %v416
        %v441 = vunpack.c.l.b16 %v417
        %v442 = vunpack.c.l.b16 %v418
        %v443 = vunpack.c.l.b16 %v419
        %v444 = vunpack.c.l.b16 %v420
        %v445 = vunpack.c.l.b16 %v421
        %v446 = vunpack.c.l.b16 %v422
        %v447 = vunpack.c.l.b16 %v423
        %v448 = vunpack.c.l.b16 %v424
        %v449 = vunpack.c.l.b16 %v425
        %v450 = vunpack.c.l.b16 %v426
        %v451 = vunpack.c.l.b16 %v427
        %v452 = vpack.c.b16 %v441, %v440
        %v453 = vpack.c.b16 %v443, %v442
        %v454 = vpack.c.b16 %v445, %v444
        %v455 = vpack.c.b16 %v447, %v446
        %v456 = vpack.c.b16 %v449, %v448
        %v457 = vpack.c.b16 %v451, %v450
        %vm464 = vcmask 785408
        %v465 = vsel %vm464, %v415, 0
        %467 = vmatprep.subr.bf16.mxu0 0
        %468 = vmatpush1.bf16.msra.mxu0 %v452
        %469 = vmatprep.subr.bf16.mxu0 0
        %470 = vmatpush1.bf16.msra.mxu0 %v453
        %471 = vmatprep.subr.bf16.mxu0 0
        %472 = vmatpush1.bf16.msra.mxu0 %v454
        %473 = vmatprep.subr.bf16.mxu0 0
        %474 = vmatpush1.bf16.msra.mxu0 %v455
        %475 = vmatprep.subr.bf16.mxu0 0
        %476 = vmatpush1.bf16.msra.mxu0 %v456
        %477 = vmatprep.subr.bf16.mxu0 0
        %478 = vmatpush1.bf16.msra.mxu0 %v457
        %479 = vmatprep.subr.bf16.mxu0 0
        %480 = vmatpush1.bf16.msra.mxu0 0
        %481 = vmatprep.subr.bf16.mxu0 0
        %482 = vmatpush1.bf16.msra.mxu0 0
        %483 = vmatprep.subr.bf16.mxu0 0
        %484 = vmatpush1.bf16.msra.mxu0 0
        %485 = vmatprep.subr.bf16.mxu0 0
        %486 = vmatpush1.bf16.msra.mxu0 0
        %487 = vmatprep.subr.bf16.mxu0 0
        %488 = vmatpush1.bf16.msra.mxu0 0
        %489 = vmatprep.subr.bf16.mxu0 0
        %490 = vmatpush1.bf16.msra.mxu0 0
        %491 = vmatprep.subr.bf16.mxu0 0
        %492 = vmatpush1.bf16.msra.mxu0 0
        %493 = vmatprep.subr.bf16.mxu0 0
        %494 = vmatpush1.bf16.msra.mxu0 0
        %495 = vmatprep.subr.bf16.mxu0 0
        %496 = vmatpush1.bf16.msra.mxu0 0
        %497 = vmatprep.subr.bf16.mxu0 0
        %498 = vmatpush1.bf16.msra.mxu0 0
        %499 = vmatprep.mubr.bf16.mxu0 0
        %500 = vmatmul.mubr.bf16.gmra.mrb[0].mxu0 %v465
        %v501 = vpop.f32.mrb[0].mxu0
        %v502 = vadd.f32 0.0, %v501
        %v503 = vpop.f32.mrb[0].mxu0
        %v504 = vpop.f32.mrb[0].mxu0
        %v505 = vadd.f32 0.0, %v504
        %v506 = vpop.f32.mrb[0].mxu0
        %507 = vdwg.mxu0
        %vm508 = vcmask 64512
        %v509 = vsel %vm508, %v502, -inf
        %vm510 = vcmask 62464
        %v511 = vsel %vm510, %v505, -inf
        %v512 = vmax.f32 %v509, %v511
        %v513 = vrot.slane %v512, 4
        %v514 = vmax.f32 %v512, %v513
        %v515 = vrot.slane %v514, 2
        %v516 = vmax.f32 %v514, %v515
        %v517 = vrot.slane %v516, 1
        %v518 = vmax.f32 %v516, %v517
        %v519 = vrot.slane %v398, 1
        %v520 = vrot.slane %v400, 2
        %v521 = vor.u32 %v519, %v520
        %522 = vrot.lane.b32.xlu0 %v521, 96
        %v523 = vpop.permute.xlu0 %522
        %v525 = vsel %vm464, %v415, %v523
        %v527 = vld [vmem:[%s3] sm:$0xf]
        %v528 = vld [vmem:[%s3 + $0x4] sm:$0xf]
        %v529 = vld [vmem:[%s3 + $0x8] sm:$0xf]
        %v530 = vld [vmem:[%s3 + $0xc] sm:$0xf]
        %v531 = vld [vmem:[%s3 + $0x10] sm:$0xf]
        %v532 = vld [vmem:[%s3 + $0x14] sm:$0xf]
        %v533 = vld [vmem:[%s3 + $0x18] sm:$0xf]
        %v534 = vld [vmem:[%s3 + $0x1c] sm:$0xf]
        %v535 = vld [vmem:[%s3 + $0x20] sm:$0xf]
        %v536 = vld [vmem:[%s3 + $0x24] sm:$0xf]
        %v537 = vld [vmem:[%s3 + $0x28] sm:$0xf]
        %v538 = vld [vmem:[%s3 + $0x2c] sm:$0xf]
        %v539 = vld [vmem:[%s3 + $0x30] sm:$0xf]
        %v540 = vld [vmem:[%s3 + $0x34] sm:$0xf]
        %v541 = vld [vmem:[%s3 + $0x38] sm:$0xf]
        %v542 = vld [vmem:[%s3 + $0x3c] sm:$0xf]
        %v559 = vunpack.c.l.b16 %v527
        %v560 = vunpack.c.l.b16 %v528
        %v561 = vunpack.c.l.b16 %v529
        %v562 = vunpack.c.l.b16 %v530
        %v563 = vunpack.c.l.b16 %v531
        %v564 = vunpack.c.l.b16 %v532
        %v565 = vunpack.c.l.b16 %v533
        %v566 = vunpack.c.l.b16 %v534
        %v567 = vunpack.c.l.b16 %v535
        %v568 = vunpack.c.l.b16 %v536
        %v569 = vunpack.c.l.b16 %v537
        %v570 = vunpack.c.l.b16 %v538
        %v571 = vunpack.c.l.b16 %v539
        %v572 = vunpack.c.l.b16 %v540
        %v573 = vunpack.c.l.b16 %v541
        %v574 = vunpack.c.l.b16 %v542
        %v575 = vpack.c.b16 %v560, %v559
        %v576 = vpack.c.b16 %v562, %v561
        %v577 = vpack.c.b16 %v564, %v563
        %v578 = vpack.c.b16 %v566, %v565
        %v579 = vpack.c.b16 %v568, %v567
        %v580 = vpack.c.b16 %v570, %v569
        %v581 = vpack.c.b16 %v572, %v571
        %v582 = vpack.c.b16 %v574, %v573
        %591 = vmatprep.subr.bf16.mxu0 0
        %592 = vmatpush1.bf16.msra.mxu0 %v575
        %593 = vmatprep.subr.bf16.mxu0 0
        %594 = vmatpush1.bf16.msra.mxu0 %v576
        %595 = vmatprep.subr.bf16.mxu0 0
        %596 = vmatpush1.bf16.msra.mxu0 %v577
        %597 = vmatprep.subr.bf16.mxu0 0
        %598 = vmatpush1.bf16.msra.mxu0 %v578
        %599 = vmatprep.subr.bf16.mxu0 0
        %600 = vmatpush1.bf16.msra.mxu0 %v579
        %601 = vmatprep.subr.bf16.mxu0 0
        %602 = vmatpush1.bf16.msra.mxu0 %v580
        %603 = vmatprep.subr.bf16.mxu0 0
        %604 = vmatpush1.bf16.msra.mxu0 %v581
        %605 = vmatprep.subr.bf16.mxu0 0
        %606 = vmatpush1.bf16.msra.mxu0 %v582
        %607 = vmatprep.subr.bf16.mxu0 0
        %608 = vmatpush1.bf16.msra.mxu0 0
        %609 = vmatprep.subr.bf16.mxu0 0
        %610 = vmatpush1.bf16.msra.mxu0 0
        %611 = vmatprep.subr.bf16.mxu0 0
        %612 = vmatpush1.bf16.msra.mxu0 0
        %613 = vmatprep.subr.bf16.mxu0 0
        %614 = vmatpush1.bf16.msra.mxu0 0
        %615 = vmatprep.subr.bf16.mxu0 0
        %616 = vmatpush1.bf16.msra.mxu0 0
        %617 = vmatprep.subr.bf16.mxu0 0
        %618 = vmatpush1.bf16.msra.mxu0 0
        %619 = vmatprep.subr.bf16.mxu0 0
        %620 = vmatpush1.bf16.msra.mxu0 0
        %621 = vmatprep.subr.bf16.mxu0 0
        %622 = vmatpush1.bf16.msra.mxu0 0
        %623 = vmatprep.mubr.bf16.mxu0 0
        %624 = vmatmul.mubr.bf16.gmra.mrb[0].mxu0 %v525
        %v625 = vpop.f32.mrb[0].mxu0
        %v626 = vadd.f32 0.0, %v625
        %v627 = vpop.f32.mrb[0].mxu0
        %v628 = vpop.f32.mrb[0].mxu0
        %v629 = vadd.f32 0.0, %v628
        %v630 = vpop.f32.mrb[0].mxu0
        %631 = vdwg.mxu0
        %v632 = vsel %vm508, %v626, -inf
        %vm633 = vcmask 61440
        %v634 = vsel %vm633, %v629, -inf
        %v635 = vmax.f32 %v632, %v634
        %v636 = vrot.slane %v635, 4
        %v637 = vmax.f32 %v635, %v636
        %v638 = vrot.slane %v637, 2
        %v639 = vmax.f32 %v637, %v638
        %v640 = vrot.slane %v639, 1
        %v641 = vmax.f32 %v639, %v640
        %v642 = vrot.slane %v396, 2
        %v643 = vld [vmem:[%s4] sm:$0xf]
        %v644 = vld [vmem:[%s4 + $0x4] sm:$0xf]
        %v645 = vld [vmem:[%s4 + $0x8] sm:$0xf]
        %v646 = vld [vmem:[%s4 + $0xc] sm:$0xf]
        %v647 = vld [vmem:[%s4 + $0x10] sm:$0xf]
        %v648 = vld [vmem:[%s4 + $0x14] sm:$0xf]
        %v649 = vld [vmem:[%s4 + $0x18] sm:$0xf]
        %v650 = vld [vmem:[%s4 + $0x1c] sm:$0xf]
        %v651 = vld [vmem:[%s4 + $0x20] sm:$0xf]
        %v652 = vld [vmem:[%s4 + $0x24] sm:$0xf]
        %v653 = vld [vmem:[%s4 + $0x28] sm:$0xf]
        %v654 = vld [vmem:[%s4 + $0x2c] sm:$0xf]
        %v655 = vld [vmem:[%s4 + $0x30] sm:$0xf]
        %v656 = vld [vmem:[%s4 + $0x34] sm:$0xf]
        %v657 = vld [vmem:[%s4 + $0x38] sm:$0xf]
        %v658 = vld [vmem:[%s4 + $0x3c] sm:$0xf]
        %v659 = vld [vmem:[%s4 + $0x40] sm:$0xf]
        %v660 = vld [vmem:[%s4 + $0x44] sm:$0xf]
        %v661 = vld [vmem:[%s4 + $0x48] sm:$0xf]
        %v662 = vld [vmem:[%s4 + $0x4c] sm:$0xf]
        %v683 = vunpack.c.l.b16 %v643
        %v684 = vunpack.c.l.b16 %v644
        %v685 = vunpack.c.l.b16 %v645
        %v686 = vunpack.c.l.b16 %v646
        %v687 = vunpack.c.l.b16 %v647
        %v688 = vunpack.c.l.b16 %v648
        %v689 = vunpack.c.l.b16 %v649
        %v690 = vunpack.c.l.b16 %v650
        %v691 = vunpack.c.l.b16 %v651
        %v692 = vunpack.c.l.b16 %v652
        %v693 = vunpack.c.l.b16 %v653
        %v694 = vunpack.c.l.b16 %v654
        %v695 = vunpack.c.l.b16 %v655
        %v696 = vunpack.c.l.b16 %v656
        %v697 = vunpack.c.l.b16 %v657
        %v698 = vunpack.c.l.b16 %v658
        %v699 = vunpack.c.l.b16 %v659
        %v700 = vunpack.c.l.b16 %v660
        %v701 = vunpack.c.l.b16 %v661
        %v702 = vunpack.c.l.b16 %v662
        %v703 = vpack.c.b16 %v684, %v683
        %v704 = vpack.c.b16 %v686, %v685
        %v705 = vpack.c.b16 %v688, %v687
        %v706 = vpack.c.b16 %v690, %v689
        %v707 = vpack.c.b16 %v692, %v691
        %v708 = vpack.c.b16 %v694, %v693
        %v709 = vpack.c.b16 %v696, %v695
        %v710 = vpack.c.b16 %v698, %v697
        %v711 = vpack.c.b16 %v700, %v699
        %v712 = vpack.c.b16 %v702, %v701
        %v724 = vsel %vm410, %v642, 0
        %726 = vmatprep.subr.bf16.mxu0 0
        %727 = vmatpush1.bf16.msra.mxu0 %v703
        %728 = vmatprep.subr.bf16.mxu0 0
        %729 = vmatpush1.bf16.msra.mxu0 %v704
        %730 = vmatprep.subr.bf16.mxu0 0
        %731 = vmatpush1.bf16.msra.mxu0 %v705
        %732 = vmatprep.subr.bf16.mxu0 0
        %733 = vmatpush1.bf16.msra.mxu0 %v706
        %734 = vmatprep.subr.bf16.mxu0 0
        %735 = vmatpush1.bf16.msra.mxu0 %v707
        %736 = vmatprep.subr.bf16.mxu0 0
        %737 = vmatpush1.bf16.msra.mxu0 %v708
        %738 = vmatprep.subr.bf16.mxu0 0
        %739 = vmatpush1.bf16.msra.mxu0 %v709
        %740 = vmatprep.subr.bf16.mxu0 0
        %741 = vmatpush1.bf16.msra.mxu0 %v710
        %742 = vmatprep.subr.bf16.mxu0 0
        %743 = vmatpush1.bf16.msra.mxu0 %v711
        %744 = vmatprep.subr.bf16.mxu0 0
        %745 = vmatpush1.bf16.msra.mxu0 %v712
        %746 = vmatprep.subr.bf16.mxu0 0
        %747 = vmatpush1.bf16.msra.mxu0 0
        %748 = vmatprep.subr.bf16.mxu0 0
        %749 = vmatpush1.bf16.msra.mxu0 0
        %750 = vmatprep.subr.bf16.mxu0 0
        %751 = vmatpush1.bf16.msra.mxu0 0
        %752 = vmatprep.subr.bf16.mxu0 0
        %753 = vmatpush1.bf16.msra.mxu0 0
        %754 = vmatprep.subr.bf16.mxu0 0
        %755 = vmatpush1.bf16.msra.mxu0 0
        %756 = vmatprep.subr.bf16.mxu0 0
        %757 = vmatpush1.bf16.msra.mxu0 0
        %758 = vmatprep.mubr.bf16.mxu0 %v724
        %759 = vmatmul.mubr.bf16.gmra.mrb[0].mxu0 %v525
        %v760 = vpop.f32.mrb[0].mxu0
        %v761 = vadd.f32 0.0, %v760
        %v762 = vpop.f32.mrb[0].mxu0
        %v763 = vpop.f32.mrb[0].mxu0
        %v764 = vadd.f32 0.0, %v763
        %v765 = vpop.f32.mrb[0].mxu0
        %766 = vdwg.mxu0
        %v767 = vsel %vm508, %v761, -inf
        %vm768 = vcmask 60416
        %v769 = vsel %vm768, %v764, -inf
        %v770 = vmax.f32 %v767, %v769
        %v771 = vrot.slane %v770, 4
        %v772 = vmax.f32 %v770, %v771
        %v773 = vrot.slane %v772, 2
        %v774 = vmax.f32 %v772, %v773
        %v775 = vrot.slane %v774, 1
        %v776 = vmax.f32 %v774, %v775
        %778 = vrot.lane.b32.xlu0 %v641, 8
        %v779 = vpop.permute.xlu0 %778
        %782 = vrot.lane.b32.xlu0 %v776, 16
        %v783 = vpop.permute.xlu0 %782
        %v785 = vsel %vm508, %v518, %v779
        %vm786 = vcmask 130048
        %v787 = vsel %vm786, %v785, %v783
        %v788 = vld [vmem:[%s5] sm:$0x1]
        %v789 = vadd.f32 %v787, %v788
        %v790 = vmax.f32 %v789, 0.0
        %v791 = vpack.c.bf16 %v790, %v790
        %v792 = vld [vmem:[%s6] sm:$0xf]
        %v793 = vld [vmem:[%s6 + $0x4] sm:$0xf]
        %v794 = vld [vmem:[%s6 + $0x8] sm:$0xf]
        %v795 = vld [vmem:[%s7] sm:$0x1]
        %v799 = vunpack.c.l.b16 %v792
        %v800 = vunpack.c.l.b16 %v793
        %v801 = vunpack.c.l.b16 %v794
        %v802 = vpack.c.b16 %v800, %v799
        %v803 = vpack.c.b16 %v801, %v801
        %vm805 = vcmask 195584
        %v807 = vsel %vm805, %v791, 0
        %vm809 = vcmask 1043456
        %v811 = vsel %vm809, %v803, 0
        %813 = vmatprep.subr.bf16.mxu0 0
        %814 = vmatpush1.bf16.msra.mxu0 %v802
        %815 = vmatprep.subr.bf16.mxu0 0
        %816 = vmatpush1.bf16.msra.mxu0 %v811
        %817 = vmatprep.subr.bf16.mxu0 0
        %818 = vmatpush1.bf16.msra.mxu0 0
        %819 = vmatprep.subr.bf16.mxu0 0
        %820 = vmatpush1.bf16.msra.mxu0 0
        %821 = vmatprep.subr.bf16.mxu0 0
        %822 = vmatpush1.bf16.msra.mxu0 0
        %823 = vmatprep.subr.bf16.mxu0 0
        %824 = vmatpush1.bf16.msra.mxu0 0
        %825 = vmatprep.subr.bf16.mxu0 0
        %826 = vmatpush1.bf16.msra.mxu0 0
        %827 = vmatprep.subr.bf16.mxu0 0
        %828 = vmatpush1.bf16.msra.mxu0 0
        %829 = vmatprep.subr.bf16.mxu0 0
        %830 = vmatpush1.bf16.msra.mxu0 0
        %831 = vmatprep.subr.bf16.mxu0 0
        %832 = vmatpush1.bf16.msra.mxu0 0
        %833 = vmatprep.subr.bf16.mxu0 0
        %834 = vmatpush1.bf16.msra.mxu0 0
        %835 = vmatprep.subr.bf16.mxu0 0
        %836 = vmatpush1.bf16.msra.mxu0 0
        %837 = vmatprep.subr.bf16.mxu0 0
        %838 = vmatpush1.bf16.msra.mxu0 0
        %839 = vmatprep.subr.bf16.mxu0 0
        %840 = vmatpush1.bf16.msra.mxu0 0
        %841 = vmatprep.subr.bf16.mxu0 0
        %842 = vmatpush1.bf16.msra.mxu0 0
        %843 = vmatprep.subr.bf16.mxu0 0
        %844 = vmatpush1.bf16.msra.mxu0 0
        %845 = vmatprep.mubr.bf16.mxu0 0
        %846 = vmatmul.mubr.bf16.gmra.mrb[0].mxu0 %v807
        %v847 = vpop.f32.mrb[0].mxu0
        %v848 = vadd.f32 %v795, %v847
        %v849 = vpop.f32.mrb[0].mxu0
        %v850 = vpop.f32.mrb[0].mxu0
        %v851 = vpop.f32.mrb[0].mxu0
        %852 = vdwg.mxu0
        %vm853 = vcmask 24576
        %854 = vst.msk [vmem:[%s293] sm:$0x1] %vm853, %v848
        %s855 = sand.u32 %s203, 1
        %s856 = scalar_lea.sflag [#allocation3], %s855
        %s857 = sand.u32 %s203, 1
        %s858 = scalar_lea.vmem [#allocation2], %s857
        // Predicated region
        $region53: #{tpu_custom_call.1} parent=51 // pred_check
          %p859 = pneg %p213
        $region54: #{tpu_custom_call.1} parent=51 // pred_check_branch
          %861 = sbr.rel (%p859) target = $region56
        $region55: #{tpu_custom_call.1} parent=51 // pred_region
          %s863 = ssub.s32 16, 16
          %864 = vsyncadd %s856, %s863
          %s865 = smul.addr %s22, 16
          %s866 = scalar_lea.hbm %s8, %s865
          %s868 = sshll.u32 %s858, 4
          %s869 = int_to_ptr.vmem [resolvable:$true] %s868
          %871 = dma.vmem_to_hbm [thread:$0]  %s869, 16, %s866, %s856
        $region56: #{tpu_custom_call.1} parent=51 // pred_fallthru
          _
      $region52: #{tpu_custom_call.1} parent=5 // pred_fallthru
        _
      %p872 = scmp.le.s32.totalorder 2, %s17
      // Predicated region
      $region57: #{tpu_custom_call.1} parent=5 // pred_check
        %p873 = pneg %p872
      $region58: #{tpu_custom_call.1} parent=5 // pred_check_branch
        %875 = sbr.rel (%p873) target = $region60
      $region59: #{tpu_custom_call.1} parent=5 // pred_region
        %s876 = ssub.s32 %s17, 2
        // Predicated region
        $region61: #{tpu_custom_call.1} parent=59 // pred_check
          %p877 = pneg %p219
        $region62: #{tpu_custom_call.1} parent=59 // pred_check_branch
          %879 = sbr.rel (%p877) target = $region64
        $region63: #{tpu_custom_call.1} parent=59 // pred_region
          %s880 = sand.u32 %s204, 1
          %s881 = scalar_lea.sflag [#allocation3], %s880
          %s882 = sand.u32 %s204, 1
          %s883 = scalar_lea.vmem [#allocation2], %s882
          %884 = dma.done %s881, 16
        $region64: #{tpu_custom_call.1} parent=59 // pred_fallthru
          _
      $region60: #{tpu_custom_call.1} parent=5 // pred_fallthru
        _
    $region6: #{tpu_custom_call.1} parent=1 // loop_footer
      %s21 = sadd.s32 1, %s17
    $region7: #{tpu_custom_call.1} parent=1 // loop_footer_branch
      %16 = sbr.rel target = $region3
    $region8: #{tpu_custom_call.1} parent=1 // loop_exit
      _
    %885 = vsyncpa [#allocation3], 1
    %s886 = scalar_lea.sflag [#allocation3], 1
    %887 = vsyncpa %s886, 1

</llo_original>
